<compile_context>
chip_gen: v6e
topology: v6e:2x2x1
jax: 0.10.0
libtpu: 0.0.40
codegen_flags: <defaults>
</compile_context>

<pallas_src>
import functools

import jax
import jax.numpy as jnp
from jax.experimental import pallas as pl
from jax.experimental.pallas import tpu as pltpu

LEAKY_SLOPE = 0.01      # F.leaky_relu default negative_slope
_SUBLANE = 16           # batch-tile alignment (covers bf16 (16,128) packing)
_MAX_TM = 2048          # cap on rows per grid step


def _round_up(n, m):
    return ((n + m - 1) // m) * m


def _device_kind():
    try:
        return jax.devices()[0].device_kind.lower()
    except Exception:
        return ""


def _default_bf16_act(kind=None):
    kind = _device_kind() if kind is None else kind
    # bf16-native VPU/EUP only on v6e / v7x; keep f32 activation math elsewhere.
    return ("v6" in kind) or ("v7" in kind)


def _choose_tm(batch, kind=None):
    """Fewest, fattest batch tiles; keep >=2 grid steps on v7x (2 TCs/chip)."""
    kind = _device_kind() if kind is None else kind
    b_aligned = _round_up(batch, _SUBLANE)
    min_steps = 2 if ("v7" in kind and b_aligned >= 2 * _SUBLANE) else 1
    tm = _round_up(pl.cdiv(b_aligned, min_steps), _SUBLANE)
    return min(tm, _MAX_TM)


def _mlp_kernel(x_ref, w1_ref, w2_ref, w3_ref, w4_ref, b_ref, o_ref,
                *, h1, h2, h3, out_dim, act_dtype):
    """sigmoid -> tanh -> tanh -> leaky_relu; bf16 MXU inputs, f32 accumulate."""
    x = x_ref[...]                       # already bf16 (cast in the wrapper)

    b_all = b_ref[...]                   # (4, bias_w) f32, one consolidated DMA
    b1 = b_all[0:1, :h1]
    b2 = b_all[1:2, :h2]
    b3 = b_all[2:3, :h3]
    b4 = b_all[3:4, :out_dim]

    # layer 1 + sigmoid
    h = jnp.dot(x, w1_ref[...], preferred_element_type=jnp.float32) + b1
    h = jax.nn.sigmoid(h.astype(act_dtype))

    # layer 2 + tanh
    h = jnp.dot(h.astype(jnp.bfloat16), w2_ref[...],
                preferred_element_type=jnp.float32) + b2
    h = jnp.tanh(h.astype(act_dtype))

    # layer 3 + tanh
    h = jnp.dot(h.astype(jnp.bfloat16), w3_ref[...],
                preferred_element_type=jnp.float32) + b3
    h = jnp.tanh(h.astype(act_dtype))

    # layer 4 + leaky_relu (VPU select); store only the true out_dim lanes
    z = jnp.dot(h.astype(jnp.bfloat16), w4_ref[...],
                preferred_element_type=jnp.float32) + b4
    o_ref[...] = jnp.where(z >= 0.0, z, LEAKY_SLOPE * z).astype(o_ref.dtype)


@functools.partial(jax.jit, static_argnames=("tm", "bf16_act"))
def _mlp_forward(x, params, *, tm, bf16_act):
    w1, w2, w3, w4 = params["w1"], params["w2"], params["w3"], params["w4"]
    b1, b2, b3, b4 = params["b1"], params["b2"], params["b3"], params["b4"]

    B, in_dim = x.shape
    h1, h2, h3 = w1.shape[1], w2.shape[1], w3.shape[1]
    out_dim = w4.shape[1]

    # --- consolidate the 4 tiny biases into one f32 array (single DMA) ---
    bias_w = max(h1, h2, h3, out_dim)
    bias = jnp.zeros((4, bias_w), jnp.float32)
    bias = bias.at[0, :h1].set(b1.reshape(-1))
    bias = bias.at[1, :h2].set(b2.reshape(-1))
    bias = bias.at[2, :h3].set(b3.reshape(-1))
    bias = bias.at[3, :out_dim].set(b4.reshape(-1))

    # --- bf16 MXU operands (f32 accumulation in-kernel) ---
    # Intentional precision tradeoff vs. the all-f32 PyTorch module.
    w1b = w1.astype(jnp.bfloat16)
    w2b = w2.astype(jnp.bfloat16)
    w3b = w3.astype(jnp.bfloat16)
    w4b = w4.astype(jnp.bfloat16)

    xb = x.astype(jnp.bfloat16)                      # halves x DMA bytes
    b_pad = _round_up(B, tm)
    if b_pad != B:
        xb = jnp.pad(xb, ((0, b_pad - B), (0, 0)))
    grid = (b_pad // tm,)

    flops = 2 * b_pad * (in_dim * h1 + h1 * h2 + h2 * h3 + h3 * out_dim)
    transcendentals = b_pad * (h1 + h2 + h3)
    bytes_accessed = (
        b_pad * in_dim * 2                                        # bf16 x
        + 2 * (w1b.size + w2b.size + w3b.size + w4b.size)         # bf16 weights
        + bias.size * 4                                           # biases
        + b_pad * out_dim * 4                                     # f32 out (unpadded)
    )

    kernel = functools.partial(
        _mlp_kernel, h1=h1, h2=h2, h3=h3, out_dim=out_dim,
        act_dtype=jnp.bfloat16 if bf16_act else jnp.float32)

    out = pl.pallas_call(
        kernel,
        out_shape=jax.ShapeDtypeStruct((b_pad, out_dim), jnp.float32),
        grid=grid,
        in_specs=[
            pl.BlockSpec((tm, in_dim), lambda i: (i, 0)),   # x: tiled over batch
            pl.BlockSpec((in_dim, h1), lambda i: (0, 0)),   # weights: VMEM-resident
            pl.BlockSpec((h1, h2), lambda i: (0, 0)),
            pl.BlockSpec((h2, h3), lambda i: (0, 0)),
            pl.BlockSpec((h3, out_dim), lambda i: (0, 0)),
            pl.BlockSpec((4, bias_w), lambda i: (0, 0)),    # consolidated biases
        ],
        out_specs=pl.BlockSpec((tm, out_dim), lambda i: (i, 0)),
        compiler_params=pltpu.CompilerParams(
            dimension_semantics=("parallel",)),
        cost_estimate=pl.CostEstimate(
            flops=flops,
            transcendentals=transcendentals,
            bytes_accessed=bytes_accessed),
    )(xb, w1b, w2b, w3b, w4b, bias)

    return out if b_pad == B else out[:B]


def mlp_forward(x, params, *, tm=None, bf16_act=None):
    """x: (B, input_dim) f32.  params: transposed f32 weights + (1, H) biases."""
    kind = _device_kind()
    if bf16_act is None:
        bf16_act = _default_bf16_act(kind)
    if tm is None:
        tm = _choose_tm(x.shape[0], kind)
    # Robustness: sublane-align and clamp any caller-provided tile size.
    tm = _round_up(max(_SUBLANE, min(tm, _round_up(x.shape[0], _SUBLANE))),
                   _SUBLANE)
    return _mlp_forward(x, params, tm=tm, bf16_act=bool(bf16_act))


def init_params(key, input_dim, h1, h2, h3, output_dim):
    """Deterministic init mirroring the PyTorch module's __init__ semantics."""
    ks = jax.random.split(key, 8)

    def linear_bias(k, fan_in, out):
        # PyTorch default Linear bias init: U(-1/sqrt(fan_in), 1/sqrt(fan_in))
        bound = 1.0 / jnp.sqrt(jnp.float32(fan_in))
        return jax.random.uniform(k, (1, out), jnp.float32, -bound, bound)

    # layers 1-3: weight ~ U(0, 1)   (nn.init.uniform_(w, 0.0, 1.0))
    w1 = jax.random.uniform(ks[0], (input_dim, h1), jnp.float32, 0.0, 1.0)
    b1 = linear_bias(ks[1], input_dim, h1)
    w2 = jax.random.uniform(ks[2], (h1, h2), jnp.float32, 0.0, 1.0)
    b2 = linear_bias(ks[3], h1, h2)
    w3 = jax.random.uniform(ks[4], (h2, h3), jnp.float32, 0.0, 1.0)
    b3 = linear_bias(ks[5], h2, h3)

    # layer 4: kaiming_uniform_(nonlinearity='leaky_relu'), default a=0
    # -> gain = sqrt(2), bound = gain * sqrt(3 / fan_in)
    gain = jnp.sqrt(2.0)
    bound4 = gain * jnp.sqrt(3.0 / jnp.float32(h3))
    w4 = jax.random.uniform(ks[6], (h3, output_dim), jnp.float32, -bound4, bound4)
    b4 = linear_bias(ks[7], h3, output_dim)

    return {"w1": w1, "b1": b1, "w2": w2, "b2": b2,
            "w3": w3, "b3": b3, "w4": w4, "b4": b4}


def mlp_reference(x, p, *, bf16_act=False):
    """Pure-JAX reference mirroring the kernel's exact numerics path."""
    act_dtype = jnp.bfloat16 if bf16_act else jnp.float32

    def dot_bf16(a, w):
        return jnp.dot(a.astype(jnp.bfloat16), w.astype(jnp.bfloat16),
                       preferred_element_type=jnp.float32)

    h = jax.nn.sigmoid((dot_bf16(x, p["w1"]) + p["b1"]).astype(act_dtype))
    h = jnp.tanh((dot_bf16(h, p["w2"]) + p["b2"]).astype(act_dtype))
    h = jnp.tanh((dot_bf16(h, p["w3"]) + p["b3"]).astype(act_dtype))
    z = dot_bf16(h, p["w4"]) + p["b4"]
    return jnp.where(z >= 0.0, z, LEAKY_SLOPE * z)


if __name__ == "__main__":
    key = jax.random.PRNGKey(0)
    k_in, k_par = jax.random.split(key)

    batch, input_dim = 256, 16
    hidden1, hidden2, hidden3, output_dim = 32, 32, 32, 8

    x = jax.random.normal(k_in, (batch, input_dim), jnp.float32)
    params = init_params(k_par, input_dim, hidden1, hidden2, hidden3, output_dim)

    bf16_act = _default_bf16_act()

    # Adaptive tiling: one fat grid step on v5e/v6e (tm=256), two on v7x.
    out = mlp_forward(x, params)
    out = jax.block_until_ready(out)

    ref = mlp_reference(x, params, bf16_act=bf16_act)
    assert out.shape == (batch, output_dim)
    if bf16_act:
        tol = dict(atol=3e-2, rtol=3e-2)   # bf16 activation path (v6e/v7x)
    else:
        tol = dict(atol=1e-4, rtol=1e-3)   # f32 activation path (v5e and older)
    assert jnp.allclose(out, ref, **tol), "mismatch vs reference"

    print("KERNEL_OK")
</pallas_src>

<mosaic_0001>
module attributes {stable_mosaic.version = 11 : i64} {
  func.func @_mlp_kernel(%arg0: i32, %arg1: memref<256x16xbf16, #tpu.memory_space<vmem>>, %arg2: memref<16x32xbf16, #tpu.memory_space<vmem>>, %arg3: memref<32x32xbf16, #tpu.memory_space<vmem>>, %arg4: memref<32x32xbf16, #tpu.memory_space<vmem>>, %arg5: memref<32x8xbf16, #tpu.memory_space<vmem>>, %arg6: memref<4x32xf32, #tpu.memory_space<vmem>>, %arg7: memref<256x8xf32, #tpu.memory_space<vmem>>) attributes {dimension_semantics = [#tpu.dimension_semantics<parallel>], iteration_bounds = array<i64: 1>, scalar_prefetch = 0 : i64, scratch_operands = 0 : i64, tpu.core_type = #tpu.core_type<tc>, window_params = [{transform_indices = @transform_0, window_bounds = array<i64: 256, 16>}, {pipeline_mode = #tpu.pipeline_mode<synchronous>, transform_indices = @transform_1, window_bounds = array<i64: 16, 32>}, {pipeline_mode = #tpu.pipeline_mode<synchronous>, transform_indices = @transform_2, window_bounds = array<i64: 32, 32>}, {pipeline_mode = #tpu.pipeline_mode<synchronous>, transform_indices = @transform_3, window_bounds = array<i64: 32, 32>}, {pipeline_mode = #tpu.pipeline_mode<synchronous>, transform_indices = @transform_4, window_bounds = array<i64: 32, 8>}, {pipeline_mode = #tpu.pipeline_mode<synchronous>, transform_indices = @transform_5, window_bounds = array<i64: 4, 32>}, {transform_indices = @transform_6, window_bounds = array<i64: 256, 8>}]} {
    %c0 = arith.constant 0 : index
    %c0_0 = arith.constant 0 : index
    %0 = vector.load %arg1[%c0, %c0_0] : memref<256x16xbf16, #tpu.memory_space<vmem>>, vector<256x16xbf16>
    %c0_1 = arith.constant 0 : index
    %c0_2 = arith.constant 0 : index
    %1 = vector.load %arg6[%c0_1, %c0_2] : memref<4x32xf32, #tpu.memory_space<vmem>>, vector<4x32xf32>
    %2 = vector.extract_strided_slice %1 {offsets = [0, 0], sizes = [1, 32], strides = [1, 1]} : vector<4x32xf32> to vector<1x32xf32>
    %3 = vector.extract_strided_slice %1 {offsets = [1, 0], sizes = [1, 32], strides = [1, 1]} : vector<4x32xf32> to vector<1x32xf32>
    %4 = vector.extract_strided_slice %1 {offsets = [2, 0], sizes = [1, 32], strides = [1, 1]} : vector<4x32xf32> to vector<1x32xf32>
    %5 = vector.extract_strided_slice %1 {offsets = [3, 0], sizes = [1, 8], strides = [1, 1]} : vector<4x32xf32> to vector<1x8xf32>
    %c0_3 = arith.constant 0 : index
    %c0_4 = arith.constant 0 : index
    %6 = vector.load %arg2[%c0_3, %c0_4] : memref<16x32xbf16, #tpu.memory_space<vmem>>, vector<16x32xbf16>
    %cst = arith.constant dense<0.000000e+00> : vector<256x32xf32>
    %7 = tpu.matmul %0, %6, %cst {dimension_numbers = #tpu.dot_dimension_numbers<[1], [0], [0], [1], [0, 0, 1, 1], [], []>} : vector<256x16xbf16>, vector<16x32xbf16>, vector<256x32xf32> -> vector<256x32xf32>
    %8 = vector.broadcast %2 : vector<1x32xf32> to vector<256x32xf32>
    %9 = arith.addf %7, %8 : vector<256x32xf32>
    %10 = arith.negf %9 : vector<256x32xf32>
    %11 = math.exp %10 : vector<256x32xf32>
    %cst_5 = arith.constant 1.000000e+00 : f32
    %12 = vector.broadcast %cst_5 : f32 to vector<256x32xf32>
    %13 = arith.addf %12, %11 : vector<256x32xf32>
    %14 = arith.divf %12, %13 : vector<256x32xf32>
    %15 = arith.truncf %14 : vector<256x32xf32> to vector<256x32xbf16>
    %c0_6 = arith.constant 0 : index
    %c0_7 = arith.constant 0 : index
    %16 = vector.load %arg3[%c0_6, %c0_7] : memref<32x32xbf16, #tpu.memory_space<vmem>>, vector<32x32xbf16>
    %cst_8 = arith.constant dense<0.000000e+00> : vector<256x32xf32>
    %17 = tpu.matmul %15, %16, %cst_8 {dimension_numbers = #tpu.dot_dimension_numbers<[1], [0], [0], [1], [0, 0, 1, 1], [], []>} : vector<256x32xbf16>, vector<32x32xbf16>, vector<256x32xf32> -> vector<256x32xf32>
    %18 = vector.broadcast %3 : vector<1x32xf32> to vector<256x32xf32>
    %19 = arith.addf %17, %18 : vector<256x32xf32>
    %20 = math.tanh %19 : vector<256x32xf32>
    %21 = arith.truncf %20 : vector<256x32xf32> to vector<256x32xbf16>
    %c0_9 = arith.constant 0 : index
    %c0_10 = arith.constant 0 : index
    %22 = vector.load %arg4[%c0_9, %c0_10] : memref<32x32xbf16, #tpu.memory_space<vmem>>, vector<32x32xbf16>
    %cst_11 = arith.constant dense<0.000000e+00> : vector<256x32xf32>
    %23 = tpu.matmul %21, %22, %cst_11 {dimension_numbers = #tpu.dot_dimension_numbers<[1], [0], [0], [1], [0, 0, 1, 1], [], []>} : vector<256x32xbf16>, vector<32x32xbf16>, vector<256x32xf32> -> vector<256x32xf32>
    %24 = vector.broadcast %4 : vector<1x32xf32> to vector<256x32xf32>
    %25 = arith.addf %23, %24 : vector<256x32xf32>
    %26 = math.tanh %25 : vector<256x32xf32>
    %27 = arith.truncf %26 : vector<256x32xf32> to vector<256x32xbf16>
    %c0_12 = arith.constant 0 : index
    %c0_13 = arith.constant 0 : index
    %28 = vector.load %arg5[%c0_12, %c0_13] : memref<32x8xbf16, #tpu.memory_space<vmem>>, vector<32x8xbf16>
    %cst_14 = arith.constant dense<0.000000e+00> : vector<256x8xf32>
    %29 = tpu.matmul %27, %28, %cst_14 {dimension_numbers = #tpu.dot_dimension_numbers<[1], [0], [0], [1], [0, 0, 1, 1], [], []>} : vector<256x32xbf16>, vector<32x8xbf16>, vector<256x8xf32> -> vector<256x8xf32>
    %30 = vector.broadcast %5 : vector<1x8xf32> to vector<256x8xf32>
    %31 = arith.addf %29, %30 : vector<256x8xf32>
    %cst_15 = arith.constant 0.000000e+00 : f32
    %32 = vector.broadcast %cst_15 : f32 to vector<256x8xf32>
    %33 = arith.cmpf oge, %31, %32 : vector<256x8xf32>
    %cst_16 = arith.constant 0.00999999977 : f32
    %34 = vector.broadcast %cst_16 : f32 to vector<256x8xf32>
    %35 = arith.mulf %34, %31 : vector<256x8xf32>
    %36 = arith.select %33, %31, %35 : vector<256x8xi1>, vector<256x8xf32>
    %c0_17 = arith.constant 0 : index
    %c0_18 = arith.constant 0 : index
    %37 = vector.load %arg7[%c0_17, %c0_18] : memref<256x8xf32, #tpu.memory_space<vmem>>, vector<256x8xf32>
    tpu.vector_store %arg7[%c0_17, %c0_18], %36 {strides = array<i32>} : memref<256x8xf32, #tpu.memory_space<vmem>>, vector<256x8xf32>,
    return
  }
  func.func @transform_0(%arg0: i32) -> (i32, i32) {
    %c0_i32 = arith.constant 0 : i32
    %c0_i32_0 = arith.constant 0 : i32
    return %arg0, %c0_i32 : i32, i32
  }
  func.func @transform_1(%arg0: i32) -> (i32, i32) {
    %c0_i32 = arith.constant 0 : i32
    %c0_i32_0 = arith.constant 0 : i32
    %c0_i32_1 = arith.constant 0 : i32
    return %c0_i32, %c0_i32_0 : i32, i32
  }
  func.func @transform_2(%arg0: i32) -> (i32, i32) {
    %c0_i32 = arith.constant 0 : i32
    %c0_i32_0 = arith.constant 0 : i32
    %c0_i32_1 = arith.constant 0 : i32
    return %c0_i32, %c0_i32_0 : i32, i32
  }
  func.func @transform_3(%arg0: i32) -> (i32, i32) {
    %c0_i32 = arith.constant 0 : i32
    %c0_i32_0 = arith.constant 0 : i32
    %c0_i32_1 = arith.constant 0 : i32
    return %c0_i32, %c0_i32_0 : i32, i32
  }
  func.func @transform_4(%arg0: i32) -> (i32, i32) {
    %c0_i32 = arith.constant 0 : i32
    %c0_i32_0 = arith.constant 0 : i32
    %c0_i32_1 = arith.constant 0 : i32
    return %c0_i32, %c0_i32_0 : i32, i32
  }
  func.func @transform_5(%arg0: i32) -> (i32, i32) {
    %c0_i32 = arith.constant 0 : i32
    %c0_i32_0 = arith.constant 0 : i32
    %c0_i32_1 = arith.constant 0 : i32
    return %c0_i32, %c0_i32_0 : i32, i32
  }
  func.func @transform_6(%arg0: i32) -> (i32, i32) {
    %c0_i32 = arith.constant 0 : i32
    %c0_i32_0 = arith.constant 0 : i32
    return %arg0, %c0_i32 : i32, i32
  }
}

</mosaic_0001>

<llo_original>
// kernel: _mlp_forward.1
$region0: #{_mlp_forward.1}
  #allocation0 [shape = 'u32[]', space=smem, size = 0x4, offset = 0x4, fixed_abs, tag = 'smem constant byte address 0x4 - core index']
  #allocation1 [shape = 'u32[144,128]{1,0:T(1,128)}', space=vmem, size = 0x12000, scoped, tag = 'internal scratch']
  %s0 = inlined_call_operand.vmem [shape: bf16[256,16], index: 0, kind: input, shape index: {}]
  %s1 = inlined_call_operand.vmem [shape: bf16[16,32], index: 1, kind: input, shape index: {}]
  %s2 = inlined_call_operand.vmem [shape: bf16[32,32], index: 2, kind: input, shape index: {}]
  %s3 = inlined_call_operand.vmem [shape: bf16[32,32], index: 3, kind: input, shape index: {}]
  %s4 = inlined_call_operand.vmem [shape: bf16[32,8], index: 4, kind: input, shape index: {}]
  %s5 = inlined_call_operand.vmem [shape: f32[4,32], index: 5, kind: input, shape index: {}]
  %s6 = inlined_call_operand.vmem [shape: f32[256,8], index: 6, kind: output, shape index: {}]
  %s7 = sld [smem:[#allocation0]]
  $region34: #{_mlp_forward.1} parent=0
    _
  %s9 = ssub.s32 1, %s7
  %s10 = scalar_select 0, %s9, %s7
  // Predicated region
  $region2: #{_mlp_forward.1} parent=0 // pred_check
    _
  $region3: #{_mlp_forward.1} parent=0 // pred_check_branch
    %12 = sbr.rel (0) target = $region5
  $region4: #{_mlp_forward.1} parent=0 // pred_region
    _
  $region5: #{_mlp_forward.1} parent=0 // pred_fallthru
    _
  // Predicated region
  $region6: #{_mlp_forward.1} parent=0 // pred_check
    _
  $region7: #{_mlp_forward.1} parent=0 // pred_check_branch
    %14 = sbr.rel (0) target = $region9
  $region8: #{_mlp_forward.1} parent=0 // pred_region
    _
  $region9: #{_mlp_forward.1} parent=0 // pred_fallthru
    _
  // Predicated region
  $region10: #{_mlp_forward.1} parent=0 // pred_check
    _
  $region11: #{_mlp_forward.1} parent=0 // pred_check_branch
    %16 = sbr.rel (0) target = $region13
  $region12: #{_mlp_forward.1} parent=0 // pred_region
    _
  $region13: #{_mlp_forward.1} parent=0 // pred_fallthru
    _
  // Predicated region
  $region14: #{_mlp_forward.1} parent=0 // pred_check
    _
  $region15: #{_mlp_forward.1} parent=0 // pred_check_branch
    %18 = sbr.rel (0) target = $region17
  $region16: #{_mlp_forward.1} parent=0 // pred_region
    _
  $region17: #{_mlp_forward.1} parent=0 // pred_fallthru
    _
  // Predicated region
  $region18: #{_mlp_forward.1} parent=0 // pred_check
    _
  $region19: #{_mlp_forward.1} parent=0 // pred_check_branch
    %20 = sbr.rel (0) target = $region21
  $region20: #{_mlp_forward.1} parent=0 // pred_region
    _
  $region21: #{_mlp_forward.1} parent=0 // pred_fallthru
    _
  // Predicated region
  $region22: #{_mlp_forward.1} parent=0 // pred_check
    _
  $region23: #{_mlp_forward.1} parent=0 // pred_check_branch
    %22 = sbr.rel (0) target = $region25
  $region24: #{_mlp_forward.1} parent=0 // pred_region
    _
  $region25: #{_mlp_forward.1} parent=0 // pred_fallthru
    _
  %v24 = vld [vmem:[%s0] sm:$0xf]
  %v25 = vld [vmem:[%s0 + $0x4] sm:$0xf]
  %v26 = vld [vmem:[%s0 + $0x8] sm:$0xf]
  %v27 = vld [vmem:[%s0 + $0xc] sm:$0xf]
  %v28 = vld [vmem:[%s0 + $0x10] sm:$0xf]
  %v29 = vld [vmem:[%s0 + $0x14] sm:$0xf]
  %v30 = vld [vmem:[%s0 + $0x18] sm:$0xf]
  %v31 = vld [vmem:[%s0 + $0x1c] sm:$0xf]
  %v32 = vld [vmem:[%s0 + $0x20] sm:$0xf]
  %v33 = vld [vmem:[%s0 + $0x24] sm:$0xf]
  %v34 = vld [vmem:[%s0 + $0x28] sm:$0xf]
  %v35 = vld [vmem:[%s0 + $0x2c] sm:$0xf]
  %v36 = vld [vmem:[%s0 + $0x30] sm:$0xf]
  %v37 = vld [vmem:[%s0 + $0x34] sm:$0xf]
  %v38 = vld [vmem:[%s0 + $0x38] sm:$0xf]
  %v39 = vld [vmem:[%s0 + $0x3c] sm:$0xf]
  %v40 = vld [vmem:[%s0 + $0x40] sm:$0xf]
  %v41 = vld [vmem:[%s0 + $0x44] sm:$0xf]
  %v42 = vld [vmem:[%s0 + $0x48] sm:$0xf]
  %v43 = vld [vmem:[%s0 + $0x4c] sm:$0xf]
  %v44 = vld [vmem:[%s0 + $0x50] sm:$0xf]
  %v45 = vld [vmem:[%s0 + $0x54] sm:$0xf]
  %v46 = vld [vmem:[%s0 + $0x58] sm:$0xf]
  %v47 = vld [vmem:[%s0 + $0x5c] sm:$0xf]
  %v48 = vld [vmem:[%s0 + $0x60] sm:$0xf]
  %v49 = vld [vmem:[%s0 + $0x64] sm:$0xf]
  %v50 = vld [vmem:[%s0 + $0x68] sm:$0xf]
  %v51 = vld [vmem:[%s0 + $0x6c] sm:$0xf]
  %v52 = vld [vmem:[%s0 + $0x70] sm:$0xf]
  %v53 = vld [vmem:[%s0 + $0x74] sm:$0xf]
  %v54 = vld [vmem:[%s0 + $0x78] sm:$0xf]
  %v55 = vld [vmem:[%s0 + $0x7c] sm:$0xf]
  %v56 = vld [vmem:[%s5] sm:$0xf]
  %v57 = vld [vmem:[%s1] sm:$0xf]
  %v58 = vld [vmem:[%s1 + $0x4] sm:$0xf]
  %v59 = vlaneseq
  %v60 = vshrl.u32 %v59, 7
  %v61 = vsub.s32 0, %v60
  %v62 = vrot.slane %v56, %v61
  %v95 = vunpack.c.l.b16 %v24
  %v96 = vunpack.c.l.b16 %v25
  %v97 = vunpack.c.l.b16 %v26
  %v98 = vunpack.c.l.b16 %v27
  %v99 = vunpack.c.l.b16 %v28
  %v100 = vunpack.c.l.b16 %v29
  %v101 = vunpack.c.l.b16 %v30
  %v102 = vunpack.c.l.b16 %v31
  %v103 = vunpack.c.l.b16 %v32
  %v104 = vunpack.c.l.b16 %v33
  %v105 = vunpack.c.l.b16 %v34
  %v106 = vunpack.c.l.b16 %v35
  %v107 = vunpack.c.l.b16 %v36
  %v108 = vunpack.c.l.b16 %v37
  %v109 = vunpack.c.l.b16 %v38
  %v110 = vunpack.c.l.b16 %v39
  %v111 = vunpack.c.l.b16 %v40
  %v112 = vunpack.c.l.b16 %v41
  %v113 = vunpack.c.l.b16 %v42
  %v114 = vunpack.c.l.b16 %v43
  %v115 = vunpack.c.l.b16 %v44
  %v116 = vunpack.c.l.b16 %v45
  %v117 = vunpack.c.l.b16 %v46
  %v118 = vunpack.c.l.b16 %v47
  %v119 = vunpack.c.l.b16 %v48
  %v120 = vunpack.c.l.b16 %v49
  %v121 = vunpack.c.l.b16 %v50
  %v122 = vunpack.c.l.b16 %v51
  %v123 = vunpack.c.l.b16 %v52
  %v124 = vunpack.c.l.b16 %v53
  %v125 = vunpack.c.l.b16 %v54
  %v126 = vunpack.c.l.b16 %v55
  %v127 = vpack.c.b16 %v96, %v95
  %v128 = vpack.c.b16 %v98, %v97
  %v129 = vpack.c.b16 %v100, %v99
  %v130 = vpack.c.b16 %v102, %v101
  %v131 = vpack.c.b16 %v104, %v103
  %v132 = vpack.c.b16 %v106, %v105
  %v133 = vpack.c.b16 %v108, %v107
  %v134 = vpack.c.b16 %v110, %v109
  %v135 = vpack.c.b16 %v112, %v111
  %v136 = vpack.c.b16 %v114, %v113
  %v137 = vpack.c.b16 %v116, %v115
  %v138 = vpack.c.b16 %v118, %v117
  %v139 = vpack.c.b16 %v120, %v119
  %v140 = vpack.c.b16 %v122, %v121
  %v141 = vpack.c.b16 %v124, %v123
  %v142 = vpack.c.b16 %v126, %v125
  %v145 = vunpack.c.l.b16 %v57
  %v146 = vunpack.c.l.b16 %v58
  %v147 = vpack.c.b16 %v146, %v145
  %vm149 = vcmask 130048
  %v151 = vsel %vm149, %v127, 0
  %v154 = vsel %vm149, %v128, 0
  %v157 = vsel %vm149, %v129, 0
  %v160 = vsel %vm149, %v130, 0
  %v163 = vsel %vm149, %v131, 0
  %v166 = vsel %vm149, %v132, 0
  %v169 = vsel %vm149, %v133, 0
  %v172 = vsel %vm149, %v134, 0
  %v175 = vsel %vm149, %v135, 0
  %v178 = vsel %vm149, %v136, 0
  %v181 = vsel %vm149, %v137, 0
  %v184 = vsel %vm149, %v138, 0
  %v187 = vsel %vm149, %v139, 0
  %v190 = vsel %vm149, %v140, 0
  %v193 = vsel %vm149, %v141, 0
  %v196 = vsel %vm149, %v142, 0
  %198 = vmatprep.subr.bf16.mxu0 0
  %199 = vmatpush1.bf16.msra.mxu0 0
  %200 = vmatprep.subr.bf16.mxu0 0
  %201 = vmatpush1.bf16.msra.mxu0 0
  %202 = vmatprep.subr.bf16.mxu0 0
  %203 = vmatpush1.bf16.msra.mxu0 0
  %204 = vmatprep.subr.bf16.mxu0 0
  %205 = vmatpush1.bf16.msra.mxu0 0
  %206 = vmatprep.subr.bf16.mxu0 0
  %207 = vmatpush1.bf16.msra.mxu0 0
  %208 = vmatprep.subr.bf16.mxu0 0
  %209 = vmatpush1.bf16.msra.mxu0 0
  %210 = vmatprep.subr.bf16.mxu0 0
  %211 = vmatpush1.bf16.msra.mxu0 0
  %212 = vmatprep.subr.bf16.mxu0 0
  %213 = vmatpush1.bf16.msra.mxu0 %v147
  %214 = vmatprep.subr.bf16.mxu0 0
  %215 = vmatpush2.bf16.msra.mxu0 0
  %216 = vmatprep.subr.bf16.mxu0 0
  %217 = vmatpush2.bf16.msra.mxu0 0
  %218 = vmatprep.subr.bf16.mxu0 0
  %219 = vmatpush2.bf16.msra.mxu0 0
  %220 = vmatprep.subr.bf16.mxu0 0
  %221 = vmatpush2.bf16.msra.mxu0 0
  %222 = vmatprep.subr.bf16.mxu0 0
  %223 = vmatpush2.bf16.msra.mxu0 0
  %224 = vmatprep.subr.bf16.mxu0 0
  %225 = vmatpush2.bf16.msra.mxu0 0
  %226 = vmatprep.subr.bf16.mxu0 0
  %227 = vmatpush2.bf16.msra.mxu0 0
  %228 = vmatprep.subr.bf16.mxu0 0
  %229 = vmatpush2.bf16.msra.mxu0 0
  %230 = vmatprep.mubr.bf16.mxu0 0
  %231 = vmatmul.mubr.bf16.gmra.mxu0 %v151
  %v232 = vpop.f32.mrf.mxu0
  %v233 = vadd.f32 %v62, %v232
  %v234 = vpop.f32.mrf.mxu0
  %v235 = vpop.f32.mrf.mxu0
  %v236 = vadd.f32 %v62, %v235
  %v237 = vpop.f32.mrf.mxu0
  %238 = vmatprep.mubr.bf16.mxu0 0
  %239 = vmatmul.mubr.bf16.gmra.mxu0 %v154
  %v240 = vpop.f32.mrf.mxu0
  %v241 = vadd.f32 %v62, %v240
  %v242 = vpop.f32.mrf.mxu0
  %v243 = vpop.f32.mrf.mxu0
  %v244 = vadd.f32 %v62, %v243
  %v245 = vpop.f32.mrf.mxu0
  %246 = vmatprep.mubr.bf16.mxu0 0
  %247 = vmatmul.mubr.bf16.gmra.mxu0 %v157
  %v248 = vpop.f32.mrf.mxu0
  %v249 = vadd.f32 %v62, %v248
  %v250 = vpop.f32.mrf.mxu0
  %v251 = vpop.f32.mrf.mxu0
  %v252 = vadd.f32 %v62, %v251
  %v253 = vpop.f32.mrf.mxu0
  %254 = vmatprep.mubr.bf16.mxu0 0
  %255 = vmatmul.mubr.bf16.gmra.mxu0 %v160
  %v256 = vpop.f32.mrf.mxu0
  %v257 = vadd.f32 %v62, %v256
  %v258 = vpop.f32.mrf.mxu0
  %v259 = vpop.f32.mrf.mxu0
  %v260 = vadd.f32 %v62, %v259
  %v261 = vpop.f32.mrf.mxu0
  %262 = vmatprep.mubr.bf16.mxu0 0
  %263 = vmatmul.mubr.bf16.gmra.mxu0 %v163
  %v264 = vpop.f32.mrf.mxu0
  %v265 = vadd.f32 %v62, %v264
  %v266 = vpop.f32.mrf.mxu0
  %v267 = vpop.f32.mrf.mxu0
  %v268 = vadd.f32 %v62, %v267
  %v269 = vpop.f32.mrf.mxu0
  %270 = vmatprep.mubr.bf16.mxu0 0
  %271 = vmatmul.mubr.bf16.gmra.mxu0 %v166
  %v272 = vpop.f32.mrf.mxu0
  %v273 = vadd.f32 %v62, %v272
  %v274 = vpop.f32.mrf.mxu0
  %v275 = vpop.f32.mrf.mxu0
  %v276 = vadd.f32 %v62, %v275
  %v277 = vpop.f32.mrf.mxu0
  %278 = vmatprep.mubr.bf16.mxu0 0
  %279 = vmatmul.mubr.bf16.gmra.mxu0 %v169
  %v280 = vpop.f32.mrf.mxu0
  %v281 = vadd.f32 %v62, %v280
  %v282 = vpop.f32.mrf.mxu0
  %v283 = vpop.f32.mrf.mxu0
  %v284 = vadd.f32 %v62, %v283
  %v285 = vpop.f32.mrf.mxu0
  %286 = vmatprep.mubr.bf16.mxu0 0
  %287 = vmatmul.mubr.bf16.gmra.mxu0 %v172
  %v288 = vpop.f32.mrf.mxu0
  %v289 = vadd.f32 %v62, %v288
  %v290 = vpop.f32.mrf.mxu0
  %v291 = vpop.f32.mrf.mxu0
  %v292 = vadd.f32 %v62, %v291
  %v293 = vpop.f32.mrf.mxu0
  %294 = vmatprep.mubr.bf16.mxu0 0
  %295 = vmatmul.mubr.bf16.gmra.mxu0 %v175
  %v296 = vpop.f32.mrf.mxu0
  %v297 = vadd.f32 %v62, %v296
  %v298 = vpop.f32.mrf.mxu0
  %v299 = vpop.f32.mrf.mxu0
  %v300 = vadd.f32 %v62, %v299
  %v301 = vpop.f32.mrf.mxu0
  %302 = vmatprep.mubr.bf16.mxu0 0
  %303 = vmatmul.mubr.bf16.gmra.mxu0 %v178
  %v304 = vpop.f32.mrf.mxu0
  %v305 = vadd.f32 %v62, %v304
  %v306 = vpop.f32.mrf.mxu0
  %v307 = vpop.f32.mrf.mxu0
  %v308 = vadd.f32 %v62, %v307
  %v309 = vpop.f32.mrf.mxu0
  %310 = vmatprep.mubr.bf16.mxu0 0
  %311 = vmatmul.mubr.bf16.gmra.mxu0 %v181
  %v312 = vpop.f32.mrf.mxu0
  %v313 = vadd.f32 %v62, %v312
  %v314 = vpop.f32.mrf.mxu0
  %v315 = vpop.f32.mrf.mxu0
  %v316 = vadd.f32 %v62, %v315
  %v317 = vpop.f32.mrf.mxu0
  %318 = vmatprep.mubr.bf16.mxu0 0
  %319 = vmatmul.mubr.bf16.gmra.mxu0 %v184
  %v320 = vpop.f32.mrf.mxu0
  %v321 = vadd.f32 %v62, %v320
  %v322 = vpop.f32.mrf.mxu0
  %v323 = vpop.f32.mrf.mxu0
  %v324 = vadd.f32 %v62, %v323
  %v325 = vpop.f32.mrf.mxu0
  %326 = vmatprep.mubr.bf16.mxu0 0
  %327 = vmatmul.mubr.bf16.gmra.mxu0 %v187
  %v328 = vpop.f32.mrf.mxu0
  %v329 = vadd.f32 %v62, %v328
  %v330 = vpop.f32.mrf.mxu0
  %v331 = vpop.f32.mrf.mxu0
  %v332 = vadd.f32 %v62, %v331
  %v333 = vpop.f32.mrf.mxu0
  %334 = vmatprep.mubr.bf16.mxu0 0
  %335 = vmatmul.mubr.bf16.gmra.mxu0 %v190
  %v336 = vpop.f32.mrf.mxu0
  %v337 = vadd.f32 %v62, %v336
  %v338 = vpop.f32.mrf.mxu0
  %v339 = vpop.f32.mrf.mxu0
  %v340 = vadd.f32 %v62, %v339
  %v341 = vpop.f32.mrf.mxu0
  %342 = vmatprep.mubr.bf16.mxu0 0
  %343 = vmatmul.mubr.bf16.gmra.mxu0 %v193
  %v344 = vpop.f32.mrf.mxu0
  %v345 = vadd.f32 %v62, %v344
  %v346 = vpop.f32.mrf.mxu0
  %v347 = vpop.f32.mrf.mxu0
  %v348 = vadd.f32 %v62, %v347
  %v349 = vpop.f32.mrf.mxu0
  %350 = vmatprep.mubr.bf16.mxu0 0
  %351 = vmatmul.mubr.bf16.gmra.mxu0 %v196
  %v352 = vpop.f32.mrf.mxu0
  %v353 = vadd.f32 %v62, %v352
  %v354 = vpop.f32.mrf.mxu0
  %v355 = vpop.f32.mrf.mxu0
  %v356 = vadd.f32 %v62, %v355
  %v357 = vpop.f32.mrf.mxu0
  %358 = vdwg.mxu0
  %v359 = vxor.u32 %v233, 2147483648
  %v360 = vxor.u32 %v236, 2147483648
  %v361 = vxor.u32 %v241, 2147483648
  %v362 = vxor.u32 %v244, 2147483648
  %v363 = vxor.u32 %v249, 2147483648
  %v364 = vxor.u32 %v252, 2147483648
  %v365 = vxor.u32 %v257, 2147483648
  %v366 = vxor.u32 %v260, 2147483648
  %v367 = vxor.u32 %v265, 2147483648
  %v368 = vxor.u32 %v268, 2147483648
  %v369 = vxor.u32 %v273, 2147483648
  %v370 = vxor.u32 %v276, 2147483648
  %v371 = vxor.u32 %v281, 2147483648
  %v372 = vxor.u32 %v284, 2147483648
  %v373 = vxor.u32 %v289, 2147483648
  %v374 = vxor.u32 %v292, 2147483648
  %v375 = vxor.u32 %v297, 2147483648
  %v376 = vxor.u32 %v300, 2147483648
  %v377 = vxor.u32 %v305, 2147483648
  %v378 = vxor.u32 %v308, 2147483648
  %v379 = vxor.u32 %v313, 2147483648
  %v380 = vxor.u32 %v316, 2147483648
  %v381 = vxor.u32 %v321, 2147483648
  %v382 = vxor.u32 %v324, 2147483648
  %v383 = vxor.u32 %v329, 2147483648
  %v384 = vxor.u32 %v332, 2147483648
  %v385 = vxor.u32 %v337, 2147483648
  %v386 = vxor.u32 %v340, 2147483648
  %v387 = vxor.u32 %v345, 2147483648
  %v388 = vxor.u32 %v348, 2147483648
  %v389 = vxor.u32 %v353, 2147483648
  %v390 = vxor.u32 %v356, 2147483648
  %v391 = vmul.f32 %v359, 1.442695
  %v392 = vpow.pop %v391
  %v393 = vmul.f32 %v360, 1.442695
  %v394 = vpow.pop %v393
  %v395 = vmul.f32 %v361, 1.442695
  %v396 = vpow.pop %v395
  %v397 = vmul.f32 %v362, 1.442695
  %v398 = vpow.pop %v397
  %v399 = vmul.f32 %v363, 1.442695
  %v400 = vpow.pop %v399
  %v401 = vmul.f32 %v364, 1.442695
  %v402 = vpow.pop %v401
  %v403 = vmul.f32 %v365, 1.442695
  %v404 = vpow.pop %v403
  %v405 = vmul.f32 %v366, 1.442695
  %v406 = vpow.pop %v405
  %v407 = vmul.f32 %v367, 1.442695
  %v408 = vpow.pop %v407
  %v409 = vmul.f32 %v368, 1.442695
  %v410 = vpow.pop %v409
  %v411 = vmul.f32 %v369, 1.442695
  %v412 = vpow.pop %v411
  %v413 = vmul.f32 %v370, 1.442695
  %v414 = vpow.pop %v413
  %v415 = vmul.f32 %v371, 1.442695
  %v416 = vpow.pop %v415
  %v417 = vmul.f32 %v372, 1.442695
  %v418 = vpow.pop %v417
  %v419 = vmul.f32 %v373, 1.442695
  %v420 = vpow.pop %v419
  %v421 = vmul.f32 %v374, 1.442695
  %v422 = vpow.pop %v421
  %v423 = vmul.f32 %v375, 1.442695
  %v424 = vpow.pop %v423
  %v425 = vmul.f32 %v376, 1.442695
  %v426 = vpow.pop %v425
  %v427 = vmul.f32 %v377, 1.442695
  %v428 = vpow.pop %v427
  %v429 = vmul.f32 %v378, 1.442695
  %v430 = vpow.pop %v429
  %v431 = vmul.f32 %v379, 1.442695
  %v432 = vpow.pop %v431
  %v433 = vmul.f32 %v380, 1.442695
  %v434 = vpow.pop %v433
  %v435 = vmul.f32 %v381, 1.442695
  %v436 = vpow.pop %v435
  %v437 = vmul.f32 %v382, 1.442695
  %v438 = vpow.pop %v437
  %v439 = vmul.f32 %v383, 1.442695
  %v440 = vpow.pop %v439
  %v441 = vmul.f32 %v384, 1.442695
  %v442 = vpow.pop %v441
  %v443 = vmul.f32 %v385, 1.442695
  %v444 = vpow.pop %v443
  %v445 = vmul.f32 %v386, 1.442695
  %v446 = vpow.pop %v445
  %v447 = vmul.f32 %v387, 1.442695
  %v448 = vpow.pop %v447
  %v449 = vmul.f32 %v388, 1.442695
  %v450 = vpow.pop %v449
  %v451 = vmul.f32 %v389, 1.442695
  %v452 = vpow.pop %v451
  %v453 = vmul.f32 %v390, 1.442695
  %v454 = vpow.pop %v453
  %v455 = vadd.f32 %v392, 1.0
  %v456 = vadd.f32 %v394, 1.0
  %v457 = vadd.f32 %v396, 1.0
  %v458 = vadd.f32 %v398, 1.0
  %v459 = vadd.f32 %v400, 1.0
  %v460 = vadd.f32 %v402, 1.0
  %v461 = vadd.f32 %v404, 1.0
  %v462 = vadd.f32 %v406, 1.0
  %v463 = vadd.f32 %v408, 1.0
  %v464 = vadd.f32 %v410, 1.0
  %v465 = vadd.f32 %v412, 1.0
  %v466 = vadd.f32 %v414, 1.0
  %v467 = vadd.f32 %v416, 1.0
  %v468 = vadd.f32 %v418, 1.0
  %v469 = vadd.f32 %v420, 1.0
  %v470 = vadd.f32 %v422, 1.0
  %v471 = vadd.f32 %v424, 1.0
  %v472 = vadd.f32 %v426, 1.0
  %v473 = vadd.f32 %v428, 1.0
  %v474 = vadd.f32 %v430, 1.0
  %v475 = vadd.f32 %v432, 1.0
  %v476 = vadd.f32 %v434, 1.0
  %v477 = vadd.f32 %v436, 1.0
  %v478 = vadd.f32 %v438, 1.0
  %v479 = vadd.f32 %v440, 1.0
  %v480 = vadd.f32 %v442, 1.0
  %v481 = vadd.f32 %v444, 1.0
  %v482 = vadd.f32 %v446, 1.0
  %v483 = vadd.f32 %v448, 1.0
  %v484 = vadd.f32 %v450, 1.0
  %v485 = vadd.f32 %v452, 1.0
  %v486 = vadd.f32 %v454, 1.0
  %v487 = vrcp.pop %v455
  %v488 = vmul.f32 1.0, %v487
  %v489 = vrcp.pop %v456
  %v490 = vmul.f32 1.0, %v489
  %v491 = vrcp.pop %v457
  %v492 = vmul.f32 1.0, %v491
  %v493 = vrcp.pop %v458
  %v494 = vmul.f32 1.0, %v493
  %v495 = vrcp.pop %v459
  %v496 = vmul.f32 1.0, %v495
  %v497 = vrcp.pop %v460
  %v498 = vmul.f32 1.0, %v497
  %v499 = vrcp.pop %v461
  %v500 = vmul.f32 1.0, %v499
  %v501 = vrcp.pop %v462
  %v502 = vmul.f32 1.0, %v501
  %v503 = vrcp.pop %v463
  %v504 = vmul.f32 1.0, %v503
  %v505 = vrcp.pop %v464
  %v506 = vmul.f32 1.0, %v505
  %v507 = vrcp.pop %v465
  %v508 = vmul.f32 1.0, %v507
  %v509 = vrcp.pop %v466
  %v510 = vmul.f32 1.0, %v509
  %v511 = vrcp.pop %v467
  %v512 = vmul.f32 1.0, %v511
  %v513 = vrcp.pop %v468
  %v514 = vmul.f32 1.0, %v513
  %v515 = vrcp.pop %v469
  %v516 = vmul.f32 1.0, %v515
  %v517 = vrcp.pop %v470
  %v518 = vmul.f32 1.0, %v517
  %v519 = vrcp.pop %v471
  %v520 = vmul.f32 1.0, %v519
  %v521 = vrcp.pop %v472
  %v522 = vmul.f32 1.0, %v521
  %v523 = vrcp.pop %v473
  %v524 = vmul.f32 1.0, %v523
  %v525 = vrcp.pop %v474
  %v526 = vmul.f32 1.0, %v525
  %v527 = vrcp.pop %v475
  %v528 = vmul.f32 1.0, %v527
  %v529 = vrcp.pop %v476
  %v530 = vmul.f32 1.0, %v529
  %v531 = vrcp.pop %v477
  %v532 = vmul.f32 1.0, %v531
  %v533 = vrcp.pop %v478
  %v534 = vmul.f32 1.0, %v533
  %v535 = vrcp.pop %v479
  %v536 = vmul.f32 1.0, %v535
  %v537 = vrcp.pop %v480
  %v538 = vmul.f32 1.0, %v537
  %v539 = vrcp.pop %v481
  %v540 = vmul.f32 1.0, %v539
  %v541 = vrcp.pop %v482
  %v542 = vmul.f32 1.0, %v541
  %v543 = vrcp.pop %v483
  %v544 = vmul.f32 1.0, %v543
  %v545 = vrcp.pop %v484
  %v546 = vmul.f32 1.0, %v545
  %v547 = vrcp.pop %v485
  %v548 = vmul.f32 1.0, %v547
  %v549 = vrcp.pop %v486
  %v550 = vmul.f32 1.0, %v549
  %v551 = vpack.c.bf16 %v490, %v488
  %v552 = vpack.c.bf16 %v494, %v492
  %v553 = vpack.c.bf16 %v498, %v496
  %v554 = vpack.c.bf16 %v502, %v500
  %v555 = vpack.c.bf16 %v506, %v504
  %v556 = vpack.c.bf16 %v510, %v508
  %v557 = vpack.c.bf16 %v514, %v512
  %v558 = vpack.c.bf16 %v518, %v516
  %v559 = vpack.c.bf16 %v522, %v520
  %v560 = vpack.c.bf16 %v526, %v524
  %v561 = vpack.c.bf16 %v530, %v528
  %v562 = vpack.c.bf16 %v534, %v532
  %v563 = vpack.c.bf16 %v538, %v536
  %v564 = vpack.c.bf16 %v542, %v540
  %v565 = vpack.c.bf16 %v546, %v544
  %v566 = vpack.c.bf16 %v550, %v548
  %v567 = vld [vmem:[%s2] sm:$0xf]
  %v568 = vld [vmem:[%s2 + $0x4] sm:$0xf]
  %v569 = vld [vmem:[%s2 + $0x8] sm:$0xf]
  %v570 = vld [vmem:[%s2 + $0xc] sm:$0xf]
  %v571 = vlaneseq
  %v572 = vshrl.u32 %v571, 7
  %v573 = vsub.s32 1, %v572
  %v574 = vrot.slane %v56, %v573
  %v579 = vunpack.c.l.b16 %v567
  %v580 = vunpack.c.l.b16 %v568
  %v581 = vunpack.c.l.b16 %v569
  %v582 = vunpack.c.l.b16 %v570
  %v583 = vpack.c.b16 %v580, %v579
  %v584 = vpack.c.b16 %v582, %v581
  %vm587 = vcmask 261120
  %v589 = vsel %vm587, %v551, 0
  %v592 = vsel %vm587, %v552, 0
  %v595 = vsel %vm587, %v553, 0
  %v598 = vsel %vm587, %v554, 0
  %v601 = vsel %vm587, %v555, 0
  %v604 = vsel %vm587, %v556, 0
  %v607 = vsel %vm587, %v557, 0
  %v610 = vsel %vm587, %v558, 0
  %v613 = vsel %vm587, %v559, 0
  %v616 = vsel %vm587, %v560, 0
  %v619 = vsel %vm587, %v561, 0
  %v622 = vsel %vm587, %v562, 0
  %v625 = vsel %vm587, %v563, 0
  %v628 = vsel %vm587, %v564, 0
  %v631 = vsel %vm587, %v565, 0
  %v634 = vsel %vm587, %v566, 0
  %636 = vmatprep.subr.bf16.mxu0 0
  %637 = vmatpush1.bf16.msra.mxu0 0
  %638 = vmatprep.subr.bf16.mxu0 0
  %639 = vmatpush1.bf16.msra.mxu0 0
  %640 = vmatprep.subr.bf16.mxu0 0
  %641 = vmatpush1.bf16.msra.mxu0 0
  %642 = vmatprep.subr.bf16.mxu0 0
  %643 = vmatpush1.bf16.msra.mxu0 0
  %644 = vmatprep.subr.bf16.mxu0 0
  %645 = vmatpush1.bf16.msra.mxu0 0
  %646 = vmatprep.subr.bf16.mxu0 0
  %647 = vmatpush1.bf16.msra.mxu0 0
  %648 = vmatprep.subr.bf16.mxu0 0
  %649 = vmatpush1.bf16.msra.mxu0 %v584
  %650 = vmatprep.subr.bf16.mxu0 0
  %651 = vmatpush1.bf16.msra.mxu0 %v583
  %652 = vmatprep.subr.bf16.mxu0 0
  %653 = vmatpush2.bf16.msra.mxu0 0
  %654 = vmatprep.subr.bf16.mxu0 0
  %655 = vmatpush2.bf16.msra.mxu0 0
  %656 = vmatprep.subr.bf16.mxu0 0
  %657 = vmatpush2.bf16.msra.mxu0 0
  %658 = vmatprep.subr.bf16.mxu0 0
  %659 = vmatpush2.bf16.msra.mxu0 0
  %660 = vmatprep.subr.bf16.mxu0 0
  %661 = vmatpush2.bf16.msra.mxu0 0
  %662 = vmatprep.subr.bf16.mxu0 0
  %663 = vmatpush2.bf16.msra.mxu0 0
  %664 = vmatprep.subr.bf16.mxu0 0
  %665 = vmatpush2.bf16.msra.mxu0 0
  %666 = vmatprep.subr.bf16.mxu0 0
  %667 = vmatpush2.bf16.msra.mxu0 0
  %668 = vmatprep.mubr.bf16.mxu0 0
  %669 = vmatmul.mubr.bf16.gmra.mxu0 %v589
  %v670 = vpop.f32.mrf.mxu0
  %v671 = vadd.f32 %v574, %v670
  %v672 = vpop.f32.mrf.mxu0
  %v673 = vpop.f32.mrf.mxu0
  %v674 = vadd.f32 %v574, %v673
  %v675 = vpop.f32.mrf.mxu0
  %676 = vmatprep.mubr.bf16.mxu0 0
  %677 = vmatmul.mubr.bf16.gmra.mxu0 %v592
  %v678 = vpop.f32.mrf.mxu0
  %v679 = vadd.f32 %v574, %v678
  %v680 = vpop.f32.mrf.mxu0
  %v681 = vpop.f32.mrf.mxu0
  %v682 = vadd.f32 %v574, %v681
  %v683 = vpop.f32.mrf.mxu0
  %684 = vmatprep.mubr.bf16.mxu0 0
  %685 = vmatmul.mubr.bf16.gmra.mxu0 %v595
  %v686 = vpop.f32.mrf.mxu0
  %v687 = vadd.f32 %v574, %v686
  %v688 = vpop.f32.mrf.mxu0
  %v689 = vpop.f32.mrf.mxu0
  %v690 = vadd.f32 %v574, %v689
  %v691 = vpop.f32.mrf.mxu0
  %692 = vmatprep.mubr.bf16.mxu0 0
  %693 = vmatmul.mubr.bf16.gmra.mxu0 %v598
  %v694 = vpop.f32.mrf.mxu0
  %v695 = vadd.f32 %v574, %v694
  %v696 = vpop.f32.mrf.mxu0
  %v697 = vpop.f32.mrf.mxu0
  %v698 = vadd.f32 %v574, %v697
  %v699 = vpop.f32.mrf.mxu0
  %700 = vmatprep.mubr.bf16.mxu0 0
  %701 = vmatmul.mubr.bf16.gmra.mxu0 %v601
  %v702 = vpop.f32.mrf.mxu0
  %v703 = vadd.f32 %v574, %v702
  %v704 = vpop.f32.mrf.mxu0
  %v705 = vpop.f32.mrf.mxu0
  %v706 = vadd.f32 %v574, %v705
  %v707 = vpop.f32.mrf.mxu0
  %708 = vmatprep.mubr.bf16.mxu0 0
  %709 = vmatmul.mubr.bf16.gmra.mxu0 %v604
  %v710 = vpop.f32.mrf.mxu0
  %v711 = vadd.f32 %v574, %v710
  %v712 = vpop.f32.mrf.mxu0
  %v713 = vpop.f32.mrf.mxu0
  %v714 = vadd.f32 %v574, %v713
  %v715 = vpop.f32.mrf.mxu0
  %716 = vmatprep.mubr.bf16.mxu0 0
  %717 = vmatmul.mubr.bf16.gmra.mxu0 %v607
  %v718 = vpop.f32.mrf.mxu0
  %v719 = vadd.f32 %v574, %v718
  %v720 = vpop.f32.mrf.mxu0
  %v721 = vpop.f32.mrf.mxu0
  %v722 = vadd.f32 %v574, %v721
  %v723 = vpop.f32.mrf.mxu0
  %724 = vmatprep.mubr.bf16.mxu0 0
  %725 = vmatmul.mubr.bf16.gmra.mxu0 %v610
  %v726 = vpop.f32.mrf.mxu0
  %v727 = vadd.f32 %v574, %v726
  %v728 = vpop.f32.mrf.mxu0
  %v729 = vpop.f32.mrf.mxu0
  %v730 = vadd.f32 %v574, %v729
  %v731 = vpop.f32.mrf.mxu0
  %732 = vmatprep.mubr.bf16.mxu0 0
  %733 = vmatmul.mubr.bf16.gmra.mxu0 %v613
  %v734 = vpop.f32.mrf.mxu0
  %v735 = vadd.f32 %v574, %v734
  %v736 = vpop.f32.mrf.mxu0
  %v737 = vpop.f32.mrf.mxu0
  %v738 = vadd.f32 %v574, %v737
  %v739 = vpop.f32.mrf.mxu0
  %740 = vmatprep.mubr.bf16.mxu0 0
  %741 = vmatmul.mubr.bf16.gmra.mxu0 %v616
  %v742 = vpop.f32.mrf.mxu0
  %v743 = vadd.f32 %v574, %v742
  %v744 = vpop.f32.mrf.mxu0
  %v745 = vpop.f32.mrf.mxu0
  %v746 = vadd.f32 %v574, %v745
  %v747 = vpop.f32.mrf.mxu0
  %748 = vmatprep.mubr.bf16.mxu0 0
  %749 = vmatmul.mubr.bf16.gmra.mxu0 %v619
  %v750 = vpop.f32.mrf.mxu0
  %v751 = vadd.f32 %v574, %v750
  %v752 = vpop.f32.mrf.mxu0
  %v753 = vpop.f32.mrf.mxu0
  %v754 = vadd.f32 %v574, %v753
  %v755 = vpop.f32.mrf.mxu0
  %756 = vmatprep.mubr.bf16.mxu0 0
  %757 = vmatmul.mubr.bf16.gmra.mxu0 %v622
  %v758 = vpop.f32.mrf.mxu0
  %v759 = vadd.f32 %v574, %v758
  %v760 = vpop.f32.mrf.mxu0
  %v761 = vpop.f32.mrf.mxu0
  %v762 = vadd.f32 %v574, %v761
  %v763 = vpop.f32.mrf.mxu0
  %764 = vmatprep.mubr.bf16.mxu0 0
  %765 = vmatmul.mubr.bf16.gmra.mxu0 %v625
  %v766 = vpop.f32.mrf.mxu0
  %v767 = vadd.f32 %v574, %v766
  %v768 = vpop.f32.mrf.mxu0
  %v769 = vpop.f32.mrf.mxu0
  %v770 = vadd.f32 %v574, %v769
  %v771 = vpop.f32.mrf.mxu0
  %772 = vmatprep.mubr.bf16.mxu0 0
  %773 = vmatmul.mubr.bf16.gmra.mxu0 %v628
  %v774 = vpop.f32.mrf.mxu0
  %v775 = vadd.f32 %v574, %v774
  %v776 = vpop.f32.mrf.mxu0
  %v777 = vpop.f32.mrf.mxu0
  %v778 = vadd.f32 %v574, %v777
  %v779 = vpop.f32.mrf.mxu0
  %780 = vmatprep.mubr.bf16.mxu0 0
  %781 = vmatmul.mubr.bf16.gmra.mxu0 %v631
  %v782 = vpop.f32.mrf.mxu0
  %v783 = vadd.f32 %v574, %v782
  %v784 = vpop.f32.mrf.mxu0
  %v785 = vpop.f32.mrf.mxu0
  %v786 = vadd.f32 %v574, %v785
  %v787 = vpop.f32.mrf.mxu0
  %788 = vmatprep.mubr.bf16.mxu0 0
  %789 = vmatmul.mubr.bf16.gmra.mxu0 %v634
  %v790 = vpop.f32.mrf.mxu0
  %v791 = vadd.f32 %v574, %v790
  %v792 = vpop.f32.mrf.mxu0
  %v793 = vpop.f32.mrf.mxu0
  %v794 = vadd.f32 %v574, %v793
  %v795 = vpop.f32.mrf.mxu0
  %796 = vdwg.mxu0
  %v797 = vtanh.pop %v671
  %v798 = vtanh.pop %v674
  %v799 = vtanh.pop %v679
  %v800 = vtanh.pop %v682
  %v801 = vtanh.pop %v687
  %v802 = vtanh.pop %v690
  %v803 = vtanh.pop %v695
  %v804 = vtanh.pop %v698
  %v805 = vtanh.pop %v703
  %v806 = vtanh.pop %v706
  %v807 = vtanh.pop %v711
  %v808 = vtanh.pop %v714
  %v809 = vtanh.pop %v719
  %v810 = vtanh.pop %v722
  %v811 = vtanh.pop %v727
  %v812 = vtanh.pop %v730
  %v813 = vtanh.pop %v735
  %v814 = vtanh.pop %v738
  %v815 = vtanh.pop %v743
  %v816 = vtanh.pop %v746
  %v817 = vtanh.pop %v751
  %v818 = vtanh.pop %v754
  %v819 = vtanh.pop %v759
  %v820 = vtanh.pop %v762
  %v821 = vtanh.pop %v767
  %v822 = vtanh.pop %v770
  %v823 = vtanh.pop %v775
  %v824 = vtanh.pop %v778
  %v825 = vtanh.pop %v783
  %v826 = vtanh.pop %v786
  %v827 = vtanh.pop %v791
  %v828 = vtanh.pop %v794
  %v829 = vpack.c.bf16 %v798, %v797
  %v830 = vpack.c.bf16 %v800, %v799
  %v831 = vpack.c.bf16 %v802, %v801
  %v832 = vpack.c.bf16 %v804, %v803
  %v833 = vpack.c.bf16 %v806, %v805
  %v834 = vpack.c.bf16 %v808, %v807
  %v835 = vpack.c.bf16 %v810, %v809
  %v836 = vpack.c.bf16 %v812, %v811
  %v837 = vpack.c.bf16 %v814, %v813
  %v838 = vpack.c.bf16 %v816, %v815
  %v839 = vpack.c.bf16 %v818, %v817
  %v840 = vpack.c.bf16 %v820, %v819
  %v841 = vpack.c.bf16 %v822, %v821
  %v842 = vpack.c.bf16 %v824, %v823
  %v843 = vpack.c.bf16 %v826, %v825
  %v844 = vpack.c.bf16 %v828, %v827
  %v845 = vld [vmem:[%s3] sm:$0xf]
  %v846 = vld [vmem:[%s3 + $0x4] sm:$0xf]
  %v847 = vld [vmem:[%s3 + $0x8] sm:$0xf]
  %v848 = vld [vmem:[%s3 + $0xc] sm:$0xf]
  %v849 = vlaneseq
  %v850 = vshrl.u32 %v849, 7
  %v851 = vsub.s32 2, %v850
  %v852 = vrot.slane %v56, %v851
  %v857 = vunpack.c.l.b16 %v845
  %v858 = vunpack.c.l.b16 %v846
  %v859 = vunpack.c.l.b16 %v847
  %v860 = vunpack.c.l.b16 %v848
  %v861 = vpack.c.b16 %v858, %v857
  %v862 = vpack.c.b16 %v860, %v859
  %v866 = vsel %vm587, %v829, 0
  %v869 = vsel %vm587, %v830, 0
  %v872 = vsel %vm587, %v831, 0
  %v875 = vsel %vm587, %v832, 0
  %v878 = vsel %vm587, %v833, 0
  %v881 = vsel %vm587, %v834, 0
  %v884 = vsel %vm587, %v835, 0
  %v887 = vsel %vm587, %v836, 0
  %v890 = vsel %vm587, %v837, 0
  %v893 = vsel %vm587, %v838, 0
  %v896 = vsel %vm587, %v839, 0
  %v899 = vsel %vm587, %v840, 0
  %v902 = vsel %vm587, %v841, 0
  %v905 = vsel %vm587, %v842, 0
  %v908 = vsel %vm587, %v843, 0
  %v911 = vsel %vm587, %v844, 0
  %913 = vmatprep.subr.bf16.mxu0 0
  %914 = vmatpush1.bf16.msra.mxu0 0
  %915 = vmatprep.subr.bf16.mxu0 0
  %916 = vmatpush1.bf16.msra.mxu0 0
  %917 = vmatprep.subr.bf16.mxu0 0
  %918 = vmatpush1.bf16.msra.mxu0 0
  %919 = vmatprep.subr.bf16.mxu0 0
  %920 = vmatpush1.bf16.msra.mxu0 0
  %921 = vmatprep.subr.bf16.mxu0 0
  %922 = vmatpush1.bf16.msra.mxu0 0
  %923 = vmatprep.subr.bf16.mxu0 0
  %924 = vmatpush1.bf16.msra.mxu0 0
  %925 = vmatprep.subr.bf16.mxu0 0
  %926 = vmatpush1.bf16.msra.mxu0 %v862
  %927 = vmatprep.subr.bf16.mxu0 0
  %928 = vmatpush1.bf16.msra.mxu0 %v861
  %929 = vmatprep.subr.bf16.mxu0 0
  %930 = vmatpush2.bf16.msra.mxu0 0
  %931 = vmatprep.subr.bf16.mxu0 0
  %932 = vmatpush2.bf16.msra.mxu0 0
  %933 = vmatprep.subr.bf16.mxu0 0
  %934 = vmatpush2.bf16.msra.mxu0 0
  %935 = vmatprep.subr.bf16.mxu0 0
  %936 = vmatpush2.bf16.msra.mxu0 0
  %937 = vmatprep.subr.bf16.mxu0 0
  %938 = vmatpush2.bf16.msra.mxu0 0
  %939 = vmatprep.subr.bf16.mxu0 0
  %940 = vmatpush2.bf16.msra.mxu0 0
  %941 = vmatprep.subr.bf16.mxu0 0
  %942 = vmatpush2.bf16.msra.mxu0 0
  %943 = vmatprep.subr.bf16.mxu0 0
  %944 = vmatpush2.bf16.msra.mxu0 0
  %945 = vmatprep.mubr.bf16.mxu0 0
  %946 = vmatmul.mubr.bf16.gmra.mxu0 %v866
  %v947 = vpop.f32.mrf.mxu0
  %v948 = vadd.f32 %v852, %v947
  %v949 = vpop.f32.mrf.mxu0
  %v950 = vpop.f32.mrf.mxu0
  %v951 = vadd.f32 %v852, %v950
  %v952 = vpop.f32.mrf.mxu0
  %953 = vmatprep.mubr.bf16.mxu0 0
  %954 = vmatmul.mubr.bf16.gmra.mxu0 %v869
  %v955 = vpop.f32.mrf.mxu0
  %v956 = vadd.f32 %v852, %v955
  %v957 = vpop.f32.mrf.mxu0
  %v958 = vpop.f32.mrf.mxu0
  %v959 = vadd.f32 %v852, %v958
  %v960 = vpop.f32.mrf.mxu0
  %961 = vmatprep.mubr.bf16.mxu0 0
  %962 = vmatmul.mubr.bf16.gmra.mxu0 %v872
  %v963 = vpop.f32.mrf.mxu0
  %v964 = vadd.f32 %v852, %v963
  %v965 = vpop.f32.mrf.mxu0
  %v966 = vpop.f32.mrf.mxu0
  %v967 = vadd.f32 %v852, %v966
  %v968 = vpop.f32.mrf.mxu0
  %969 = vmatprep.mubr.bf16.mxu0 0
  %970 = vmatmul.mubr.bf16.gmra.mxu0 %v875
  %v971 = vpop.f32.mrf.mxu0
  %v972 = vadd.f32 %v852, %v971
  %v973 = vpop.f32.mrf.mxu0
  %v974 = vpop.f32.mrf.mxu0
  %v975 = vadd.f32 %v852, %v974
  %v976 = vpop.f32.mrf.mxu0
  %977 = vmatprep.mubr.bf16.mxu0 0
  %978 = vmatmul.mubr.bf16.gmra.mxu0 %v878
  %v979 = vpop.f32.mrf.mxu0
  %v980 = vadd.f32 %v852, %v979
  %v981 = vpop.f32.mrf.mxu0
  %v982 = vpop.f32.mrf.mxu0
  %v983 = vadd.f32 %v852, %v982
  %v984 = vpop.f32.mrf.mxu0
  %985 = vmatprep.mubr.bf16.mxu0 0
  %986 = vmatmul.mubr.bf16.gmra.mxu0 %v881
  %v987 = vpop.f32.mrf.mxu0
  %v988 = vadd.f32 %v852, %v987
  %v989 = vpop.f32.mrf.mxu0
  %v990 = vpop.f32.mrf.mxu0
  %v991 = vadd.f32 %v852, %v990
  %v992 = vpop.f32.mrf.mxu0
  %993 = vmatprep.mubr.bf16.mxu0 0
  %994 = vmatmul.mubr.bf16.gmra.mxu0 %v884
  %v995 = vpop.f32.mrf.mxu0
  %v996 = vadd.f32 %v852, %v995
  %v997 = vpop.f32.mrf.mxu0
  %v998 = vpop.f32.mrf.mxu0
  %v999 = vadd.f32 %v852, %v998
  %v1000 = vpop.f32.mrf.mxu0
  %1001 = vmatprep.mubr.bf16.mxu0 0
  %1002 = vmatmul.mubr.bf16.gmra.mxu0 %v887
  %v1003 = vpop.f32.mrf.mxu0
  %v1004 = vadd.f32 %v852, %v1003
  %v1005 = vpop.f32.mrf.mxu0
  %v1006 = vpop.f32.mrf.mxu0
  %v1007 = vadd.f32 %v852, %v1006
  %v1008 = vpop.f32.mrf.mxu0
  %1009 = vmatprep.mubr.bf16.mxu0 0
  %1010 = vmatmul.mubr.bf16.gmra.mxu0 %v890
  %v1011 = vpop.f32.mrf.mxu0
  %v1012 = vadd.f32 %v852, %v1011
  %v1013 = vpop.f32.mrf.mxu0
  %v1014 = vpop.f32.mrf.mxu0
  %v1015 = vadd.f32 %v852, %v1014
  %v1016 = vpop.f32.mrf.mxu0
  %1017 = vmatprep.mubr.bf16.mxu0 0
  %1018 = vmatmul.mubr.bf16.gmra.mxu0 %v893
  %v1019 = vpop.f32.mrf.mxu0
  %v1020 = vadd.f32 %v852, %v1019
  %v1021 = vpop.f32.mrf.mxu0
  %v1022 = vpop.f32.mrf.mxu0
  %v1023 = vadd.f32 %v852, %v1022
  %v1024 = vpop.f32.mrf.mxu0
  %1025 = vmatprep.mubr.bf16.mxu0 0
  %1026 = vmatmul.mubr.bf16.gmra.mxu0 %v896
  %v1027 = vpop.f32.mrf.mxu0
  %v1028 = vadd.f32 %v852, %v1027
  %v1029 = vpop.f32.mrf.mxu0
  %v1030 = vpop.f32.mrf.mxu0
  %v1031 = vadd.f32 %v852, %v1030
  %v1032 = vpop.f32.mrf.mxu0
  %1033 = vmatprep.mubr.bf16.mxu0 0
  %1034 = vmatmul.mubr.bf16.gmra.mxu0 %v899
  %v1035 = vpop.f32.mrf.mxu0
  %v1036 = vadd.f32 %v852, %v1035
  %v1037 = vpop.f32.mrf.mxu0
  %v1038 = vpop.f32.mrf.mxu0
  %v1039 = vadd.f32 %v852, %v1038
  %v1040 = vpop.f32.mrf.mxu0
  %1041 = vmatprep.mubr.bf16.mxu0 0
  %1042 = vmatmul.mubr.bf16.gmra.mxu0 %v902
  %v1043 = vpop.f32.mrf.mxu0
  %v1044 = vadd.f32 %v852, %v1043
  %v1045 = vpop.f32.mrf.mxu0
  %v1046 = vpop.f32.mrf.mxu0
  %v1047 = vadd.f32 %v852, %v1046
  %v1048 = vpop.f32.mrf.mxu0
  %1049 = vmatprep.mubr.bf16.mxu0 0
  %1050 = vmatmul.mubr.bf16.gmra.mxu0 %v905
  %v1051 = vpop.f32.mrf.mxu0
  %v1052 = vadd.f32 %v852, %v1051
  %v1053 = vpop.f32.mrf.mxu0
  %v1054 = vpop.f32.mrf.mxu0
  %v1055 = vadd.f32 %v852, %v1054
  %v1056 = vpop.f32.mrf.mxu0
  %1057 = vmatprep.mubr.bf16.mxu0 0
  %1058 = vmatmul.mubr.bf16.gmra.mxu0 %v908
  %v1059 = vpop.f32.mrf.mxu0
  %v1060 = vadd.f32 %v852, %v1059
  %v1061 = vpop.f32.mrf.mxu0
  %v1062 = vpop.f32.mrf.mxu0
  %v1063 = vadd.f32 %v852, %v1062
  %v1064 = vpop.f32.mrf.mxu0
  %1065 = vmatprep.mubr.bf16.mxu0 0
  %1066 = vmatmul.mubr.bf16.gmra.mxu0 %v911
  %v1067 = vpop.f32.mrf.mxu0
  %v1068 = vadd.f32 %v852, %v1067
  %v1069 = vpop.f32.mrf.mxu0
  %v1070 = vpop.f32.mrf.mxu0
  %v1071 = vadd.f32 %v852, %v1070
  %v1072 = vpop.f32.mrf.mxu0
  %1073 = vdwg.mxu0
  %v1074 = vtanh.pop %v948
  %v1075 = vtanh.pop %v951
  %v1076 = vtanh.pop %v956
  %v1077 = vtanh.pop %v959
  %v1078 = vtanh.pop %v964
  %v1079 = vtanh.pop %v967
  %v1080 = vtanh.pop %v972
  %v1081 = vtanh.pop %v975
  %v1082 = vtanh.pop %v980
  %v1083 = vtanh.pop %v983
  %v1084 = vtanh.pop %v988
  %v1085 = vtanh.pop %v991
  %v1086 = vtanh.pop %v996
  %v1087 = vtanh.pop %v999
  %v1088 = vtanh.pop %v1004
  %v1089 = vtanh.pop %v1007
  %v1090 = vtanh.pop %v1012
  %v1091 = vtanh.pop %v1015
  %v1092 = vtanh.pop %v1020
  %v1093 = vtanh.pop %v1023
  %v1094 = vtanh.pop %v1028
  %v1095 = vtanh.pop %v1031
  %v1096 = vtanh.pop %v1036
  %v1097 = vtanh.pop %v1039
  %v1098 = vtanh.pop %v1044
  %v1099 = vtanh.pop %v1047
  %v1100 = vtanh.pop %v1052
  %v1101 = vtanh.pop %v1055
  %v1102 = vtanh.pop %v1060
  %v1103 = vtanh.pop %v1063
  %v1104 = vtanh.pop %v1068
  %v1105 = vtanh.pop %v1071
  %v1106 = vpack.c.bf16 %v1075, %v1074
  %v1107 = vpack.c.bf16 %v1077, %v1076
  %v1108 = vpack.c.bf16 %v1079, %v1078
  %v1109 = vpack.c.bf16 %v1081, %v1080
  %v1110 = vpack.c.bf16 %v1083, %v1082
  %v1111 = vpack.c.bf16 %v1085, %v1084
  %v1112 = vpack.c.bf16 %v1087, %v1086
  %v1113 = vpack.c.bf16 %v1089, %v1088
  %v1114 = vpack.c.bf16 %v1091, %v1090
  %v1115 = vpack.c.bf16 %v1093, %v1092
  %v1116 = vpack.c.bf16 %v1095, %v1094
  %v1117 = vpack.c.bf16 %v1097, %v1096
  %v1118 = vpack.c.bf16 %v1099, %v1098
  %v1119 = vpack.c.bf16 %v1101, %v1100
  %v1120 = vpack.c.bf16 %v1103, %v1102
  %v1121 = vpack.c.bf16 %v1105, %v1104
  %v1122 = vld [vmem:[%s4] sm:$0xf]
  %v1123 = vld [vmem:[%s4 + $0x4] sm:$0xf]
  %v1124 = vld [vmem:[%s4 + $0x8] sm:$0xf]
  %v1125 = vld [vmem:[%s4 + $0xc] sm:$0xf]
  %v1126 = vlaneseq
  %v1127 = vshrl.u32 %v1126, 7
  %v1128 = vsub.s32 3, %v1127
  %v1129 = vrot.slane %v56, %v1128
  %v1134 = vunpack.c.l.b16 %v1122
  %v1135 = vunpack.c.l.b16 %v1123
  %v1136 = vunpack.c.l.b16 %v1124
  %v1137 = vunpack.c.l.b16 %v1125
  %v1138 = vpack.c.b16 %v1135, %v1134
  %v1139 = vpack.c.b16 %v1137, %v1136
  %v1143 = vsel %vm587, %v1106, 0
  %v1146 = vsel %vm587, %v1107, 0
  %v1149 = vsel %vm587, %v1108, 0
  %v1152 = vsel %vm587, %v1109, 0
  %v1155 = vsel %vm587, %v1110, 0
  %v1158 = vsel %vm587, %v1111, 0
  %v1161 = vsel %vm587, %v1112, 0
  %v1164 = vsel %vm587, %v1113, 0
  %v1167 = vsel %vm587, %v1114, 0
  %v1170 = vsel %vm587, %v1115, 0
  %v1173 = vsel %vm587, %v1116, 0
  %v1176 = vsel %vm587, %v1117, 0
  %v1179 = vsel %vm587, %v1118, 0
  %v1182 = vsel %vm587, %v1119, 0
  %v1185 = vsel %vm587, %v1120, 0
  %v1188 = vsel %vm587, %v1121, 0
  %1190 = vmatprep.subr.bf16.mxu0 0
  %1191 = vmatpush1.bf16.msra.mxu0 0
  %1192 = vmatprep.subr.bf16.mxu0 0
  %1193 = vmatpush1.bf16.msra.mxu0 0
  %1194 = vmatprep.subr.bf16.mxu0 0
  %1195 = vmatpush1.bf16.msra.mxu0 0
  %1196 = vmatprep.subr.bf16.mxu0 0
  %1197 = vmatpush1.bf16.msra.mxu0 0
  %1198 = vmatprep.subr.bf16.mxu0 0
  %1199 = vmatpush1.bf16.msra.mxu0 0
  %1200 = vmatprep.subr.bf16.mxu0 0
  %1201 = vmatpush1.bf16.msra.mxu0 0
  %1202 = vmatprep.subr.bf16.mxu0 0
  %1203 = vmatpush1.bf16.msra.mxu0 %v1139
  %1204 = vmatprep.subr.bf16.mxu0 0
  %1205 = vmatpush1.bf16.msra.mxu0 %v1138
  %1206 = vmatprep.subr.bf16.mxu0 0
  %1207 = vmatpush2.bf16.msra.mxu0 0
  %1208 = vmatprep.subr.bf16.mxu0 0
  %1209 = vmatpush2.bf16.msra.mxu0 0
  %1210 = vmatprep.subr.bf16.mxu0 0
  %1211 = vmatpush2.bf16.msra.mxu0 0
  %1212 = vmatprep.subr.bf16.mxu0 0
  %1213 = vmatpush2.bf16.msra.mxu0 0
  %1214 = vmatprep.subr.bf16.mxu0 0
  %1215 = vmatpush2.bf16.msra.mxu0 0
  %1216 = vmatprep.subr.bf16.mxu0 0
  %1217 = vmatpush2.bf16.msra.mxu0 0
  %1218 = vmatprep.subr.bf16.mxu0 0
  %1219 = vmatpush2.bf16.msra.mxu0 0
  %1220 = vmatprep.subr.bf16.mxu0 0
  %1221 = vmatpush2.bf16.msra.mxu0 0
  %1222 = vmatprep.mubr.bf16.mxu0 0
  %1223 = vmatmul.mubr.bf16.gmra.mxu0 %v1143
  %v1224 = vpop.f32.mrf.mxu0
  %v1225 = vadd.f32 %v1129, %v1224
  %v1226 = vpop.f32.mrf.mxu0
  %v1227 = vpop.f32.mrf.mxu0
  %v1228 = vadd.f32 %v1129, %v1227
  %v1229 = vpop.f32.mrf.mxu0
  %1230 = vmatprep.mubr.bf16.mxu0 0
  %1231 = vmatmul.mubr.bf16.gmra.mxu0 %v1146
  %v1232 = vpop.f32.mrf.mxu0
  %v1233 = vadd.f32 %v1129, %v1232
  %v1234 = vpop.f32.mrf.mxu0
  %v1235 = vpop.f32.mrf.mxu0
  %v1236 = vadd.f32 %v1129, %v1235
  %v1237 = vpop.f32.mrf.mxu0
  %1238 = vmatprep.mubr.bf16.mxu0 0
  %1239 = vmatmul.mubr.bf16.gmra.mxu0 %v1149
  %v1240 = vpop.f32.mrf.mxu0
  %v1241 = vadd.f32 %v1129, %v1240
  %v1242 = vpop.f32.mrf.mxu0
  %v1243 = vpop.f32.mrf.mxu0
  %v1244 = vadd.f32 %v1129, %v1243
  %v1245 = vpop.f32.mrf.mxu0
  %1246 = vmatprep.mubr.bf16.mxu0 0
  %1247 = vmatmul.mubr.bf16.gmra.mxu0 %v1152
  %v1248 = vpop.f32.mrf.mxu0
  %v1249 = vadd.f32 %v1129, %v1248
  %v1250 = vpop.f32.mrf.mxu0
  %v1251 = vpop.f32.mrf.mxu0
  %v1252 = vadd.f32 %v1129, %v1251
  %v1253 = vpop.f32.mrf.mxu0
  %1254 = vmatprep.mubr.bf16.mxu0 0
  %1255 = vmatmul.mubr.bf16.gmra.mxu0 %v1155
  %v1256 = vpop.f32.mrf.mxu0
  %v1257 = vadd.f32 %v1129, %v1256
  %v1258 = vpop.f32.mrf.mxu0
  %v1259 = vpop.f32.mrf.mxu0
  %v1260 = vadd.f32 %v1129, %v1259
  %v1261 = vpop.f32.mrf.mxu0
  %1262 = vmatprep.mubr.bf16.mxu0 0
  %1263 = vmatmul.mubr.bf16.gmra.mxu0 %v1158
  %v1264 = vpop.f32.mrf.mxu0
  %v1265 = vadd.f32 %v1129, %v1264
  %v1266 = vpop.f32.mrf.mxu0
  %v1267 = vpop.f32.mrf.mxu0
  %v1268 = vadd.f32 %v1129, %v1267
  %v1269 = vpop.f32.mrf.mxu0
  %1270 = vmatprep.mubr.bf16.mxu0 0
  %1271 = vmatmul.mubr.bf16.gmra.mxu0 %v1161
  %v1272 = vpop.f32.mrf.mxu0
  %v1273 = vadd.f32 %v1129, %v1272
  %v1274 = vpop.f32.mrf.mxu0
  %v1275 = vpop.f32.mrf.mxu0
  %v1276 = vadd.f32 %v1129, %v1275
  %v1277 = vpop.f32.mrf.mxu0
  %1278 = vmatprep.mubr.bf16.mxu0 0
  %1279 = vmatmul.mubr.bf16.gmra.mxu0 %v1164
  %v1280 = vpop.f32.mrf.mxu0
  %v1281 = vadd.f32 %v1129, %v1280
  %v1282 = vpop.f32.mrf.mxu0
  %v1283 = vpop.f32.mrf.mxu0
  %v1284 = vadd.f32 %v1129, %v1283
  %v1285 = vpop.f32.mrf.mxu0
  %1286 = vmatprep.mubr.bf16.mxu0 0
  %1287 = vmatmul.mubr.bf16.gmra.mxu0 %v1167
  %v1288 = vpop.f32.mrf.mxu0
  %v1289 = vadd.f32 %v1129, %v1288
  %v1290 = vpop.f32.mrf.mxu0
  %v1291 = vpop.f32.mrf.mxu0
  %v1292 = vadd.f32 %v1129, %v1291
  %v1293 = vpop.f32.mrf.mxu0
  %1294 = vmatprep.mubr.bf16.mxu0 0
  %1295 = vmatmul.mubr.bf16.gmra.mxu0 %v1170
  %v1296 = vpop.f32.mrf.mxu0
  %v1297 = vadd.f32 %v1129, %v1296
  %v1298 = vpop.f32.mrf.mxu0
  %v1299 = vpop.f32.mrf.mxu0
  %v1300 = vadd.f32 %v1129, %v1299
  %v1301 = vpop.f32.mrf.mxu0
  %1302 = vmatprep.mubr.bf16.mxu0 0
  %1303 = vmatmul.mubr.bf16.gmra.mxu0 %v1173
  %v1304 = vpop.f32.mrf.mxu0
  %v1305 = vadd.f32 %v1129, %v1304
  %v1306 = vpop.f32.mrf.mxu0
  %v1307 = vpop.f32.mrf.mxu0
  %v1308 = vadd.f32 %v1129, %v1307
  %v1309 = vpop.f32.mrf.mxu0
  %1310 = vmatprep.mubr.bf16.mxu0 0
  %1311 = vmatmul.mubr.bf16.gmra.mxu0 %v1176
  %v1312 = vpop.f32.mrf.mxu0
  %v1313 = vadd.f32 %v1129, %v1312
  %v1314 = vpop.f32.mrf.mxu0
  %v1315 = vpop.f32.mrf.mxu0
  %v1316 = vadd.f32 %v1129, %v1315
  %v1317 = vpop.f32.mrf.mxu0
  %1318 = vmatprep.mubr.bf16.mxu0 0
  %1319 = vmatmul.mubr.bf16.gmra.mxu0 %v1179
  %v1320 = vpop.f32.mrf.mxu0
  %v1321 = vadd.f32 %v1129, %v1320
  %v1322 = vpop.f32.mrf.mxu0
  %v1323 = vpop.f32.mrf.mxu0
  %v1324 = vadd.f32 %v1129, %v1323
  %v1325 = vpop.f32.mrf.mxu0
  %1326 = vmatprep.mubr.bf16.mxu0 0
  %1327 = vmatmul.mubr.bf16.gmra.mxu0 %v1182
  %v1328 = vpop.f32.mrf.mxu0
  %v1329 = vadd.f32 %v1129, %v1328
  %v1330 = vpop.f32.mrf.mxu0
  %v1331 = vpop.f32.mrf.mxu0
  %v1332 = vadd.f32 %v1129, %v1331
  %v1333 = vpop.f32.mrf.mxu0
  %1334 = vmatprep.mubr.bf16.mxu0 0
  %1335 = vmatmul.mubr.bf16.gmra.mxu0 %v1185
  %v1336 = vpop.f32.mrf.mxu0
  %v1337 = vadd.f32 %v1129, %v1336
  %v1338 = vpop.f32.mrf.mxu0
  %v1339 = vpop.f32.mrf.mxu0
  %v1340 = vadd.f32 %v1129, %v1339
  %v1341 = vpop.f32.mrf.mxu0
  %1342 = vmatprep.mubr.bf16.mxu0 0
  %1343 = vmatmul.mubr.bf16.gmra.mxu0 %v1188
  %v1344 = vpop.f32.mrf.mxu0
  %v1345 = vadd.f32 %v1129, %v1344
  %v1346 = vpop.f32.mrf.mxu0
  %v1347 = vpop.f32.mrf.mxu0
  %v1348 = vadd.f32 %v1129, %v1347
  %v1349 = vpop.f32.mrf.mxu0
  %1350 = vdwg.mxu0
  %vm1351 = vcmp.ge.f32.partialorder %v1225, 0.0
  %vm1352 = vcmp.ge.f32.partialorder %v1228, 0.0
  %vm1353 = vcmp.ge.f32.partialorder %v1233, 0.0
  %vm1354 = vcmp.ge.f32.partialorder %v1236, 0.0
  %vm1355 = vcmp.ge.f32.partialorder %v1241, 0.0
  %vm1356 = vcmp.ge.f32.partialorder %v1244, 0.0
  %vm1357 = vcmp.ge.f32.partialorder %v1249, 0.0
  %vm1358 = vcmp.ge.f32.partialorder %v1252, 0.0
  %vm1359 = vcmp.ge.f32.partialorder %v1257, 0.0
  %vm1360 = vcmp.ge.f32.partialorder %v1260, 0.0
  %vm1361 = vcmp.ge.f32.partialorder %v1265, 0.0
  %vm1362 = vcmp.ge.f32.partialorder %v1268, 0.0
  %vm1363 = vcmp.ge.f32.partialorder %v1273, 0.0
  %vm1364 = vcmp.ge.f32.partialorder %v1276, 0.0
  %vm1365 = vcmp.ge.f32.partialorder %v1281, 0.0
  %vm1366 = vcmp.ge.f32.partialorder %v1284, 0.0
  %vm1367 = vcmp.ge.f32.partialorder %v1289, 0.0
  %vm1368 = vcmp.ge.f32.partialorder %v1292, 0.0
  %vm1369 = vcmp.ge.f32.partialorder %v1297, 0.0
  %vm1370 = vcmp.ge.f32.partialorder %v1300, 0.0
  %vm1371 = vcmp.ge.f32.partialorder %v1305, 0.0
  %vm1372 = vcmp.ge.f32.partialorder %v1308, 0.0
  %vm1373 = vcmp.ge.f32.partialorder %v1313, 0.0
  %vm1374 = vcmp.ge.f32.partialorder %v1316, 0.0
  %vm1375 = vcmp.ge.f32.partialorder %v1321, 0.0
  %vm1376 = vcmp.ge.f32.partialorder %v1324, 0.0
  %vm1377 = vcmp.ge.f32.partialorder %v1329, 0.0
  %vm1378 = vcmp.ge.f32.partialorder %v1332, 0.0
  %vm1379 = vcmp.ge.f32.partialorder %v1337, 0.0
  %vm1380 = vcmp.ge.f32.partialorder %v1340, 0.0
  %vm1381 = vcmp.ge.f32.partialorder %v1345, 0.0
  %vm1382 = vcmp.ge.f32.partialorder %v1348, 0.0
  %v1383 = vmul.f32 %v1225, 0.01
  %v1384 = vmul.f32 %v1228, 0.01
  %v1385 = vmul.f32 %v1233, 0.01
  %v1386 = vmul.f32 %v1236, 0.01
  %v1387 = vmul.f32 %v1241, 0.01
  %v1388 = vmul.f32 %v1244, 0.01
  %v1389 = vmul.f32 %v1249, 0.01
  %v1390 = vmul.f32 %v1252, 0.01
  %v1391 = vmul.f32 %v1257, 0.01
  %v1392 = vmul.f32 %v1260, 0.01
  %v1393 = vmul.f32 %v1265, 0.01
  %v1394 = vmul.f32 %v1268, 0.01
  %v1395 = vmul.f32 %v1273, 0.01
  %v1396 = vmul.f32 %v1276, 0.01
  %v1397 = vmul.f32 %v1281, 0.01
  %v1398 = vmul.f32 %v1284, 0.01
  %v1399 = vmul.f32 %v1289, 0.01
  %v1400 = vmul.f32 %v1292, 0.01
  %v1401 = vmul.f32 %v1297, 0.01
  %v1402 = vmul.f32 %v1300, 0.01
  %v1403 = vmul.f32 %v1305, 0.01
  %v1404 = vmul.f32 %v1308, 0.01
  %v1405 = vmul.f32 %v1313, 0.01
  %v1406 = vmul.f32 %v1316, 0.01
  %v1407 = vmul.f32 %v1321, 0.01
  %v1408 = vmul.f32 %v1324, 0.01
  %v1409 = vmul.f32 %v1329, 0.01
  %v1410 = vmul.f32 %v1332, 0.01
  %v1411 = vmul.f32 %v1337, 0.01
  %v1412 = vmul.f32 %v1340, 0.01
  %v1413 = vmul.f32 %v1345, 0.01
  %v1414 = vmul.f32 %v1348, 0.01
  %v1415 = vsel %vm1351, %v1225, %v1383
  %v1416 = vsel %vm1352, %v1228, %v1384
  %v1417 = vsel %vm1353, %v1233, %v1385
  %v1418 = vsel %vm1354, %v1236, %v1386
  %v1419 = vsel %vm1355, %v1241, %v1387
  %v1420 = vsel %vm1356, %v1244, %v1388
  %v1421 = vsel %vm1357, %v1249, %v1389
  %v1422 = vsel %vm1358, %v1252, %v1390
  %v1423 = vsel %vm1359, %v1257, %v1391
  %v1424 = vsel %vm1360, %v1260, %v1392
  %v1425 = vsel %vm1361, %v1265, %v1393
  %v1426 = vsel %vm1362, %v1268, %v1394
  %v1427 = vsel %vm1363, %v1273, %v1395
  %v1428 = vsel %vm1364, %v1276, %v1396
  %v1429 = vsel %vm1365, %v1281, %v1397
  %v1430 = vsel %vm1366, %v1284, %v1398
  %v1431 = vsel %vm1367, %v1289, %v1399
  %v1432 = vsel %vm1368, %v1292, %v1400
  %v1433 = vsel %vm1369, %v1297, %v1401
  %v1434 = vsel %vm1370, %v1300, %v1402
  %v1435 = vsel %vm1371, %v1305, %v1403
  %v1436 = vsel %vm1372, %v1308, %v1404
  %v1437 = vsel %vm1373, %v1313, %v1405
  %v1438 = vsel %vm1374, %v1316, %v1406
  %v1439 = vsel %vm1375, %v1321, %v1407
  %v1440 = vsel %vm1376, %v1324, %v1408
  %v1441 = vsel %vm1377, %v1329, %v1409
  %v1442 = vsel %vm1378, %v1332, %v1410
  %v1443 = vsel %vm1379, %v1337, %v1411
  %v1444 = vsel %vm1380, %v1340, %v1412
  %v1445 = vsel %vm1381, %v1345, %v1413
  %v1446 = vsel %vm1382, %v1348, %v1414
  %vm1447 = vcmask 64512
  %1448 = vst.msk [vmem:[%s6] sm:$0xff] %vm1447, %v1415
  %1449 = vst.msk [vmem:[%s6 + $0x8] sm:$0xff] %vm1447, %v1416
  %1450 = vst.msk [vmem:[%s6 + $0x10] sm:$0xff] %vm1447, %v1417
  %1451 = vst.msk [vmem:[%s6 + $0x18] sm:$0xff] %vm1447, %v1418
  %1452 = vst.msk [vmem:[%s6 + $0x20] sm:$0xff] %vm1447, %v1419
  %1453 = vst.msk [vmem:[%s6 + $0x28] sm:$0xff] %vm1447, %v1420
  %1454 = vst.msk [vmem:[%s6 + $0x30] sm:$0xff] %vm1447, %v1421
  %1455 = vst.msk [vmem:[%s6 + $0x38] sm:$0xff] %vm1447, %v1422
  %1456 = vst.msk [vmem:[%s6 + $0x40] sm:$0xff] %vm1447, %v1423
  %1457 = vst.msk [vmem:[%s6 + $0x48] sm:$0xff] %vm1447, %v1424
  %1458 = vst.msk [vmem:[%s6 + $0x50] sm:$0xff] %vm1447, %v1425
  %1459 = vst.msk [vmem:[%s6 + $0x58] sm:$0xff] %vm1447, %v1426
  %1460 = vst.msk [vmem:[%s6 + $0x60] sm:$0xff] %vm1447, %v1427
  %1461 = vst.msk [vmem:[%s6 + $0x68] sm:$0xff] %vm1447, %v1428
  %1462 = vst.msk [vmem:[%s6 + $0x70] sm:$0xff] %vm1447, %v1429
  %1463 = vst.msk [vmem:[%s6 + $0x78] sm:$0xff] %vm1447, %v1430
  %1464 = vst.msk [vmem:[%s6 + $0x80] sm:$0xff] %vm1447, %v1431
  %1465 = vst.msk [vmem:[%s6 + $0x88] sm:$0xff] %vm1447, %v1432
  %1466 = vst.msk [vmem:[%s6 + $0x90] sm:$0xff] %vm1447, %v1433
  %1467 = vst.msk [vmem:[%s6 + $0x98] sm:$0xff] %vm1447, %v1434
  %1468 = vst.msk [vmem:[%s6 + $0xa0] sm:$0xff] %vm1447, %v1435
  %1469 = vst.msk [vmem:[%s6 + $0xa8] sm:$0xff] %vm1447, %v1436
  %1470 = vst.msk [vmem:[%s6 + $0xb0] sm:$0xff] %vm1447, %v1437
  %1471 = vst.msk [vmem:[%s6 + $0xb8] sm:$0xff] %vm1447, %v1438
  %1472 = vst.msk [vmem:[%s6 + $0xc0] sm:$0xff] %vm1447, %v1439
  %1473 = vst.msk [vmem:[%s6 + $0xc8] sm:$0xff] %vm1447, %v1440
  %1474 = vst.msk [vmem:[%s6 + $0xd0] sm:$0xff] %vm1447, %v1441
  %1475 = vst.msk [vmem:[%s6 + $0xd8] sm:$0xff] %vm1447, %v1442
  %1476 = vst.msk [vmem:[%s6 + $0xe0] sm:$0xff] %vm1447, %v1443
  %1477 = vst.msk [vmem:[%s6 + $0xe8] sm:$0xff] %vm1447, %v1444
  %1478 = vst.msk [vmem:[%s6 + $0xf0] sm:$0xff] %vm1447, %v1445
  %1479 = vst.msk [vmem:[%s6 + $0xf8] sm:$0xff] %vm1447, %v1446
  // Predicated region
  $region26: #{_mlp_forward.1} parent=0 // pred_check
    _
  $region27: #{_mlp_forward.1} parent=0 // pred_check_branch
    %1481 = sbr.rel (0) target = $region29
  $region28: #{_mlp_forward.1} parent=0 // pred_region
    _
  $region29: #{_mlp_forward.1} parent=0 // pred_fallthru
    _
  // Predicated region
  $region30: #{_mlp_forward.1} parent=0 // pred_check
    _
  $region31: #{_mlp_forward.1} parent=0 // pred_check_branch
    %1483 = sbr.rel (0) target = $region33
  $region32: #{_mlp_forward.1} parent=0 // pred_region
    _
  $region33: #{_mlp_forward.1} parent=0 // pred_fallthru
    _

</llo_original>
